<compile_context>
chip_gen: v7x
topology: tpu7x:2x2x1
jax: 0.10.0
libtpu: 0.0.40
codegen_flags: <defaults>
</compile_context>

<pallas_src>
import jax
import jax.numpy as jnp
from jax.experimental import pallas as pl
from jax.experimental.pallas import tpu as pltpu


def _round_up(x, m):
    return (x + m - 1) // m * m


def _generator_kernel(x_ref, w1_ref, b1_ref, w2_ref, b2_ref, w3_ref, b3_ref,
                      o_ref):
    """Fused 3-layer MLP on one (tm, D) batch tile.

    Matmuls hit the MXU back-to-back (bf16 or f32 inputs, f32 accumulation);
    bias add / LeakyReLU run on the VPU and tanh on the EUP, all in f32, with
    activations staying in vregs/VMEM between layers.
    """
    def linear(h, w_ref, b_ref):
        lhs = h if h.dtype == w_ref.dtype else h.astype(w_ref.dtype)
        return (jnp.dot(lhs, w_ref[...], preferred_element_type=jnp.float32)
                + b_ref[...])

    h = linear(x_ref[...], w1_ref, b1_ref)
    h = jnp.maximum(h, 0.2 * h)                      # LeakyReLU(0.2)
    h = linear(h, w2_ref, b2_ref)
    h = jnp.maximum(h, 0.2 * h)                      # LeakyReLU(0.2)
    h = linear(h, w3_ref, b3_ref)
    o_ref[...] = jnp.tanh(h).astype(o_ref.dtype)     # tanh on EUP, cast on store


def prepare_generator_params(params, *, matmul_dtype=jnp.float32):
    """One-time (per-training-step / per-deploy) param prep, hoisted out of the
    forward path: cast weights to the MXU input dtype, keep biases (1, D) f32."""
    prep = {}
    for i in (1, 2, 3):
        w = jnp.asarray(params[f"w{i}"], jnp.float32)
        b = jnp.asarray(params[f"b{i}"], jnp.float32).reshape(1, -1)
        prep[f"w{i}"] = w.astype(matmul_dtype)
        prep[f"b{i}"] = b
    return prep


def _pick_tm(B, cap=512):
    """Batch-tile rows: >=2 grid steps when possible (v7x two-TC sharding +
    DMA/compute overlap), multiple of 8 sublanes, capped at 512 rows."""
    if B <= 8:
        return B                                  # block rows == full batch dim
    return max(8, min(cap, _round_up(-(-B // 2), 8)))


def _normalize_tm(tm, B):
    tm = min(tm, B)
    if tm == B:
        return tm                                 # full-dim block, always legal
    return max(8, (tm // 8) * 8)                  # sublane-aligned tile


def generator_forward(x, prepared_params, *, tm=None):
    """x: (B, D). prepared_params: output of prepare_generator_params.
    Output dtype follows x.dtype (pass bf16 x for a fully bf16 data path)."""
    B, D = x.shape
    p = prepared_params
    assert p["w1"].shape == (D, D), "param / input feature-dim mismatch"

    tm = _pick_tm(B) if tm is None else _normalize_tm(tm, B)
    grid = (pl.cdiv(B, tm),)

    x_spec = pl.BlockSpec((tm, D), lambda i: (i, 0))   # pipelined per batch tile
    w_spec = pl.BlockSpec((D, D), lambda i: (0, 0))    # constant -> VMEM-resident
    b_spec = pl.BlockSpec((1, D), lambda i: (0, 0))    # constant -> VMEM-resident
    o_spec = pl.BlockSpec((tm, D), lambda i: (i, 0))

    io_bytes = jnp.dtype(x.dtype).itemsize
    w_bytes = jnp.dtype(p["w1"].dtype).itemsize
    cost = pl.CostEstimate(
        flops=6 * B * D * D,                            # 3 matmuls, 2*B*D*D each
        transcendentals=B * D,                          # tanh
        bytes_accessed=2 * B * D * io_bytes + 3 * D * D * w_bytes + 3 * D * 4,
    )

    return pl.pallas_call(
        _generator_kernel,
        out_shape=jax.ShapeDtypeStruct((B, D), x.dtype),
        grid_spec=pltpu.PrefetchScalarGridSpec(
            num_scalar_prefetch=0,
            grid=grid,
            in_specs=[x_spec, w_spec, b_spec, w_spec, b_spec, w_spec, b_spec],
            out_specs=o_spec,
        ),
        compiler_params=pltpu.CompilerParams(
            dimension_semantics=("parallel",),   # shard batch tiles across TCs
        ),
        cost_estimate=cost,
    )(x, p["w1"], p["b1"], p["w2"], p["b2"], p["w3"], p["b3"])


def init_generator_params(key, hidden_size):
    """Mimics PyTorch nn.Linear defaults: weight, bias ~ U(-1/sqrt(fan_in), 1/sqrt(fan_in)).
    Weights stored as (in, out)."""
    D = hidden_size * 2
    bound = 1.0 / (D ** 0.5)
    keys = jax.random.split(key, 6)
    params = {}
    for i in range(3):
        w = jax.random.uniform(keys[2 * i], (D, D), jnp.float32, -bound, bound)
        b = jax.random.uniform(keys[2 * i + 1], (1, D), jnp.float32, -bound, bound)
        params[f"w{i + 1}"] = w
        params[f"b{i + 1}"] = b
    return params


def generator_reference(x, params):
    """Pure-JAX reference of the same forward pass (for correctness check)."""
    h = x @ params["w1"] + params["b1"]
    h = jnp.where(h >= 0.0, h, 0.2 * h)
    h = h @ params["w2"] + params["b2"]
    h = jnp.where(h >= 0.0, h, 0.2 * h)
    h = h @ params["w3"] + params["b3"]
    return jnp.tanh(h)


if __name__ == "__main__":
    hidden_size = 32          # options['hidden_size']
    D = hidden_size * 2       # input_dim = 64

    key = jax.random.PRNGKey(0)
    k_p, k_x, k_x2 = jax.random.split(key, 3)
    params = init_generator_params(k_p, hidden_size)

    # Constant param prep happens once, outside the forward path.
    prep_f32 = prepare_generator_params(params)

    # 1) Small batch, f32 data path (single tile).
    x = jax.random.normal(k_x, (8, D), jnp.float32)
    out = jax.block_until_ready(generator_forward(x, prep_f32))
    ref = generator_reference(x, params)
    assert out.shape == (8, D)
    assert jnp.allclose(out, ref, atol=1e-5, rtol=1e-5), "f32 small-batch mismatch"

    # 2) Larger, non-tile-aligned batch exercising the parallel batch grid
    #    (3 tiles of 128 rows, last tile partial) with weights VMEM-resident.
    B2 = 300
    x2 = jax.random.normal(k_x2, (B2, D), jnp.float32)
    out2 = jax.block_until_ready(generator_forward(x2, prep_f32, tm=128))
    ref2 = generator_reference(x2, params)
    assert out2.shape == (B2, D)
    assert jnp.allclose(out2, ref2, atol=1e-5, rtol=1e-5), "f32 tiled-batch mismatch"

    # 3) Fully-bf16 data path: bf16 weights (pre-cast once), bf16 x, bf16 out,
    #    f32 accumulation + f32 elementwise epilogue in-kernel.
    prep_bf16 = prepare_generator_params(params, matmul_dtype=jnp.bfloat16)
    x2_bf16 = x2.astype(jnp.bfloat16)
    out3 = jax.block_until_ready(generator_forward(x2_bf16, prep_bf16))
    assert out3.shape == (B2, D) and out3.dtype == jnp.bfloat16
    out3_f32 = out3.astype(jnp.float32)
    assert jnp.all(jnp.isfinite(out3_f32))
    assert jnp.allclose(out3_f32, ref2, atol=1e-1, rtol=1e-1), "bf16 path diverged"

    print("KERNEL_OK")
</pallas_src>

<mosaic_0001>
module attributes {stable_mosaic.version = 11 : i64} {
  func.func @_generator_kernel(%arg0: i32, %arg1: memref<8x64xf32, #tpu.memory_space<vmem>>, %arg2: memref<64x64xf32, #tpu.memory_space<vmem>>, %arg3: memref<1x64xf32, #tpu.memory_space<vmem>>, %arg4: memref<64x64xf32, #tpu.memory_space<vmem>>, %arg5: memref<1x64xf32, #tpu.memory_space<vmem>>, %arg6: memref<64x64xf32, #tpu.memory_space<vmem>>, %arg7: memref<1x64xf32, #tpu.memory_space<vmem>>, %arg8: memref<8x64xf32, #tpu.memory_space<vmem>>) attributes {dimension_semantics = [#tpu.dimension_semantics<parallel>], iteration_bounds = array<i64: 1>, scalar_prefetch = 0 : i64, scratch_operands = 0 : i64, tpu.core_type = #tpu.core_type<tc>, window_params = [{transform_indices = @transform_0, window_bounds = array<i64: 8, 64>}, {pipeline_mode = #tpu.pipeline_mode<synchronous>, transform_indices = @transform_1, window_bounds = array<i64: 64, 64>}, {pipeline_mode = #tpu.pipeline_mode<synchronous>, transform_indices = @transform_2, window_bounds = array<i64: 1, 64>}, {pipeline_mode = #tpu.pipeline_mode<synchronous>, transform_indices = @transform_3, window_bounds = array<i64: 64, 64>}, {pipeline_mode = #tpu.pipeline_mode<synchronous>, transform_indices = @transform_4, window_bounds = array<i64: 1, 64>}, {pipeline_mode = #tpu.pipeline_mode<synchronous>, transform_indices = @transform_5, window_bounds = array<i64: 64, 64>}, {pipeline_mode = #tpu.pipeline_mode<synchronous>, transform_indices = @transform_6, window_bounds = array<i64: 1, 64>}, {transform_indices = @transform_7, window_bounds = array<i64: 8, 64>}]} {
    %c0 = arith.constant 0 : index
    %c0_0 = arith.constant 0 : index
    %0 = vector.load %arg1[%c0, %c0_0] : memref<8x64xf32, #tpu.memory_space<vmem>>, vector<8x64xf32>
    %c0_1 = arith.constant 0 : index
    %c0_2 = arith.constant 0 : index
    %1 = vector.load %arg2[%c0_1, %c0_2] : memref<64x64xf32, #tpu.memory_space<vmem>>, vector<64x64xf32>
    %cst = arith.constant dense<0.000000e+00> : vector<8x64xf32>
    %2 = tpu.matmul %0, %1, %cst {dimension_numbers = #tpu.dot_dimension_numbers<[1], [0], [0], [1], [0, 0, 1, 1], [], []>} : vector<8x64xf32>, vector<64x64xf32>, vector<8x64xf32> -> vector<8x64xf32>
    %c0_3 = arith.constant 0 : index
    %c0_4 = arith.constant 0 : index
    %3 = vector.load %arg3[%c0_3, %c0_4] : memref<1x64xf32, #tpu.memory_space<vmem>>, vector<1x64xf32>
    %4 = vector.broadcast %3 : vector<1x64xf32> to vector<8x64xf32>
    %5 = arith.addf %2, %4 : vector<8x64xf32>
    %cst_5 = arith.constant 2.000000e-01 : f32
    %6 = vector.broadcast %cst_5 : f32 to vector<8x64xf32>
    %7 = arith.mulf %6, %5 : vector<8x64xf32>
    %8 = arith.maximumf %5, %7 : vector<8x64xf32>
    %c0_6 = arith.constant 0 : index
    %c0_7 = arith.constant 0 : index
    %9 = vector.load %arg4[%c0_6, %c0_7] : memref<64x64xf32, #tpu.memory_space<vmem>>, vector<64x64xf32>
    %cst_8 = arith.constant dense<0.000000e+00> : vector<8x64xf32>
    %10 = tpu.matmul %8, %9, %cst_8 {dimension_numbers = #tpu.dot_dimension_numbers<[1], [0], [0], [1], [0, 0, 1, 1], [], []>} : vector<8x64xf32>, vector<64x64xf32>, vector<8x64xf32> -> vector<8x64xf32>
    %c0_9 = arith.constant 0 : index
    %c0_10 = arith.constant 0 : index
    %11 = vector.load %arg5[%c0_9, %c0_10] : memref<1x64xf32, #tpu.memory_space<vmem>>, vector<1x64xf32>
    %12 = vector.broadcast %11 : vector<1x64xf32> to vector<8x64xf32>
    %13 = arith.addf %10, %12 : vector<8x64xf32>
    %cst_11 = arith.constant 2.000000e-01 : f32
    %14 = vector.broadcast %cst_11 : f32 to vector<8x64xf32>
    %15 = arith.mulf %14, %13 : vector<8x64xf32>
    %16 = arith.maximumf %13, %15 : vector<8x64xf32>
    %c0_12 = arith.constant 0 : index
    %c0_13 = arith.constant 0 : index
    %17 = vector.load %arg6[%c0_12, %c0_13] : memref<64x64xf32, #tpu.memory_space<vmem>>, vector<64x64xf32>
    %cst_14 = arith.constant dense<0.000000e+00> : vector<8x64xf32>
    %18 = tpu.matmul %16, %17, %cst_14 {dimension_numbers = #tpu.dot_dimension_numbers<[1], [0], [0], [1], [0, 0, 1, 1], [], []>} : vector<8x64xf32>, vector<64x64xf32>, vector<8x64xf32> -> vector<8x64xf32>
    %c0_15 = arith.constant 0 : index
    %c0_16 = arith.constant 0 : index
    %19 = vector.load %arg7[%c0_15, %c0_16] : memref<1x64xf32, #tpu.memory_space<vmem>>, vector<1x64xf32>
    %20 = vector.broadcast %19 : vector<1x64xf32> to vector<8x64xf32>
    %21 = arith.addf %18, %20 : vector<8x64xf32>
    %22 = math.tanh %21 : vector<8x64xf32>
    %c0_17 = arith.constant 0 : index
    %c0_18 = arith.constant 0 : index
    %23 = vector.load %arg8[%c0_17, %c0_18] : memref<8x64xf32, #tpu.memory_space<vmem>>, vector<8x64xf32>
    tpu.vector_store %arg8[%c0_17, %c0_18], %22 {strides = array<i32>} : memref<8x64xf32, #tpu.memory_space<vmem>>, vector<8x64xf32>,
    return
  }
  func.func @transform_0(%arg0: i32) -> (i32, i32) {
    %c0_i32 = arith.constant 0 : i32
    %c0_i32_0 = arith.constant 0 : i32
    return %arg0, %c0_i32 : i32, i32
  }
  func.func @transform_1(%arg0: i32) -> (i32, i32) {
    %c0_i32 = arith.constant 0 : i32
    %c0_i32_0 = arith.constant 0 : i32
    %c0_i32_1 = arith.constant 0 : i32
    return %c0_i32, %c0_i32_0 : i32, i32
  }
  func.func @transform_2(%arg0: i32) -> (i32, i32) {
    %c0_i32 = arith.constant 0 : i32
    %c0_i32_0 = arith.constant 0 : i32
    %c0_i32_1 = arith.constant 0 : i32
    return %c0_i32, %c0_i32_0 : i32, i32
  }
  func.func @transform_3(%arg0: i32) -> (i32, i32) {
    %c0_i32 = arith.constant 0 : i32
    %c0_i32_0 = arith.constant 0 : i32
    %c0_i32_1 = arith.constant 0 : i32
    return %c0_i32, %c0_i32_0 : i32, i32
  }
  func.func @transform_4(%arg0: i32) -> (i32, i32) {
    %c0_i32 = arith.constant 0 : i32
    %c0_i32_0 = arith.constant 0 : i32
    %c0_i32_1 = arith.constant 0 : i32
    return %c0_i32, %c0_i32_0 : i32, i32
  }
  func.func @transform_5(%arg0: i32) -> (i32, i32) {
    %c0_i32 = arith.constant 0 : i32
    %c0_i32_0 = arith.constant 0 : i32
    %c0_i32_1 = arith.constant 0 : i32
    return %c0_i32, %c0_i32_0 : i32, i32
  }
  func.func @transform_6(%arg0: i32) -> (i32, i32) {
    %c0_i32 = arith.constant 0 : i32
    %c0_i32_0 = arith.constant 0 : i32
    %c0_i32_1 = arith.constant 0 : i32
    return %c0_i32, %c0_i32_0 : i32, i32
  }
  func.func @transform_7(%arg0: i32) -> (i32, i32) {
    %c0_i32 = arith.constant 0 : i32
    %c0_i32_0 = arith.constant 0 : i32
    return %arg0, %c0_i32 : i32, i32
  }
}

</mosaic_0001>

<llo_original>
// kernel: tpu_custom_call.1
$region0: #{tpu_custom_call.1}
  #allocation0 [shape = 'u32[]', space=smem, size = 0x4, offset = 0x4, fixed_abs, tag = 'smem constant byte address 0x4 - core index']
  #allocation1 [shape = 'u32[144,128]{1,0:T(1,128)}', space=vmem, size = 0x12000, scoped, tag = 'internal scratch']
  %s0 = inlined_call_operand.hbm [shape: f32[8,64], index: 0, kind: input, shape index: {}]
  %s1 = inlined_call_operand.hbm [shape: f32[64,64], index: 1, kind: input, shape index: {}]
  %s2 = inlined_call_operand.vmem [shape: f32[1,64], index: 2, kind: input, shape index: {}]
  %s3 = inlined_call_operand.hbm [shape: f32[64,64], index: 3, kind: input, shape index: {}]
  %s4 = inlined_call_operand.vmem [shape: f32[1,64], index: 4, kind: input, shape index: {}]
  %s5 = inlined_call_operand.hbm [shape: f32[64,64], index: 5, kind: input, shape index: {}]
  %s6 = inlined_call_operand.vmem [shape: f32[1,64], index: 6, kind: input, shape index: {}]
  %s7 = inlined_call_operand.hbm [shape: f32[8,64], index: 7, kind: output, shape index: {}]
  %s8 = sld [smem:[#allocation0]]
  $region54: #{tpu_custom_call.1} parent=0
    _
  %s10 = ssub.s32 1, %s8
  %s11 = scalar_select 0, %s10, %s8
  $region1: #{tpu_custom_call.1} parent=0
    #allocation2 [shape = 'u8[4096]{0}', space=vmem, size = 0x1000, scoped, tag = 'input window, operand 0, single buffered']
    #allocation3 [shape = 's32[1]{0}', space=sflag, size = 0x4, scoped, tag = 'scoped memory for tpu_custom_call.1']
    #allocation4 [shape = 's32[1]{0}', space=sflag, size = 0x4, scoped, tag = 'scoped memory for tpu_custom_call.1']
    #allocation5 [shape = 'u8[32768]{0}', space=vmem, size = 0x8000, scoped, tag = 'input window, operand 1, single buffered']
    #allocation6 [shape = 's32[1]{0}', space=sflag, size = 0x4, scoped, tag = 'scoped memory for tpu_custom_call.1']
    #allocation7 [shape = 'u8[32768]{0}', space=vmem, size = 0x8000, scoped, tag = 'input window, operand 3, single buffered']
    #allocation8 [shape = 'u8[32768]{0}', space=vmem, size = 0x8000, scoped, tag = 'input window, operand 5, single buffered']
    #allocation9 [shape = 's32[1]{0}', space=sflag, size = 0x4, scoped, tag = 'scoped memory for tpu_custom_call.1']
    #allocation10 [shape = 'u8[4096]{0}', space=vmem, size = 0x1000, scoped, tag = 'output window, operand 0, single buffered']
    %12 = vsyncpa [#allocation3], 0
    %13 = vsyncpa [#allocation6], 0
    %14 = vsyncpa [#allocation9], 0
    %15 = vsyncpa [#allocation4], 0
    // Predicated region
    $region2: #{tpu_custom_call.1} parent=1 // pred_check
      _
    $region3: #{tpu_custom_call.1} parent=1 // pred_check_branch
      %17 = sbr.rel (0) target = $region5
    $region4: #{tpu_custom_call.1} parent=1 // pred_region
      %s19 = ssub.s32 128, 128
      %20 = vsyncadd [#allocation3], %s19
      %s22 = sshll.u32 [#allocation2], 4
      %s23 = int_to_ptr.vmem [resolvable:$true] %s22
      %25 = dma.hbm_to_vmem [thread:$0]  %s0, 128, %s23, [#allocation3]
    $region5: #{tpu_custom_call.1} parent=1 // pred_fallthru
      _
    // Predicated region
    $region6: #{tpu_custom_call.1} parent=1 // pred_check
      _
    $region7: #{tpu_custom_call.1} parent=1 // pred_check_branch
      %27 = sbr.rel (0) target = $region9
    $region8: #{tpu_custom_call.1} parent=1 // pred_region
      %s29 = ssub.s32 1024, 1024
      %30 = vsyncadd [#allocation6], %s29
      %s31 = sshll.u32 [#allocation5], 4
      %s32 = int_to_ptr.vmem [resolvable:$true] %s31
      %37 = dma.hbm_to_vmem [thread:$0]  %s1, 1024, %s32, [#allocation6], 128, 128, 8
    $region9: #{tpu_custom_call.1} parent=1 // pred_fallthru
      _
    // Predicated region
    $region10: #{tpu_custom_call.1} parent=1 // pred_check
      _
    $region11: #{tpu_custom_call.1} parent=1 // pred_check_branch
      %39 = sbr.rel (0) target = $region13
    $region12: #{tpu_custom_call.1} parent=1 // pred_region
      _
    $region13: #{tpu_custom_call.1} parent=1 // pred_fallthru
      _
    // Predicated region
    $region14: #{tpu_custom_call.1} parent=1 // pred_check
      _
    $region15: #{tpu_custom_call.1} parent=1 // pred_check_branch
      %41 = sbr.rel (0) target = $region17
    $region16: #{tpu_custom_call.1} parent=1 // pred_region
      %s43 = ssub.s32 1024, 1024
      %44 = vsyncadd [#allocation6], %s43
      %s45 = sshll.u32 [#allocation7], 4
      %s46 = int_to_ptr.vmem [resolvable:$true] %s45
      %51 = dma.hbm_to_vmem [thread:$0]  %s3, 1024, %s46, [#allocation6], 128, 128, 8
    $region17: #{tpu_custom_call.1} parent=1 // pred_fallthru
      _
    // Predicated region
    $region18: #{tpu_custom_call.1} parent=1 // pred_check
      _
    $region19: #{tpu_custom_call.1} parent=1 // pred_check_branch
      %53 = sbr.rel (0) target = $region21
    $region20: #{tpu_custom_call.1} parent=1 // pred_region
      _
    $region21: #{tpu_custom_call.1} parent=1 // pred_fallthru
      _
    // Predicated region
    $region22: #{tpu_custom_call.1} parent=1 // pred_check
      _
    $region23: #{tpu_custom_call.1} parent=1 // pred_check_branch
      %55 = sbr.rel (0) target = $region25
    $region24: #{tpu_custom_call.1} parent=1 // pred_region
      %s57 = ssub.s32 1024, 1024
      %58 = vsyncadd [#allocation9], %s57
      %s59 = sshll.u32 [#allocation8], 4
      %s60 = int_to_ptr.vmem [resolvable:$true] %s59
      %65 = dma.hbm_to_vmem [thread:$0]  %s5, 1024, %s60, [#allocation9], 128, 128, 8
    $region25: #{tpu_custom_call.1} parent=1 // pred_fallthru
      _
    // Predicated region
    $region26: #{tpu_custom_call.1} parent=1 // pred_check
      _
    $region27: #{tpu_custom_call.1} parent=1 // pred_check_branch
      %67 = sbr.rel (0) target = $region29
    $region28: #{tpu_custom_call.1} parent=1 // pred_region
      _
    $region29: #{tpu_custom_call.1} parent=1 // pred_fallthru
      _
    // Predicated region
    $region30: #{tpu_custom_call.1} parent=1 // pred_check
      _
    $region31: #{tpu_custom_call.1} parent=1 // pred_check_branch
      %69 = sbr.rel (0) target = $region33
    $region32: #{tpu_custom_call.1} parent=1 // pred_region
      %70 = dma.done [#allocation3], 128
    $region33: #{tpu_custom_call.1} parent=1 // pred_fallthru
      _
    // Predicated region
    $region34: #{tpu_custom_call.1} parent=1 // pred_check
      _
    $region35: #{tpu_custom_call.1} parent=1 // pred_check_branch
      %72 = sbr.rel (0) target = $region37
    $region36: #{tpu_custom_call.1} parent=1 // pred_region
      %73 = dma.done [#allocation6], 1024
    $region37: #{tpu_custom_call.1} parent=1 // pred_fallthru
      _
    // Predicated region
    $region38: #{tpu_custom_call.1} parent=1 // pred_check
      _
    $region39: #{tpu_custom_call.1} parent=1 // pred_check_branch
      %75 = sbr.rel (0) target = $region41
    $region40: #{tpu_custom_call.1} parent=1 // pred_region
      %76 = dma.done [#allocation6], 1024
    $region41: #{tpu_custom_call.1} parent=1 // pred_fallthru
      _
    // Predicated region
    $region42: #{tpu_custom_call.1} parent=1 // pred_check
      _
    $region43: #{tpu_custom_call.1} parent=1 // pred_check_branch
      %78 = sbr.rel (0) target = $region45
    $region44: #{tpu_custom_call.1} parent=1 // pred_region
      %79 = dma.done [#allocation9], 1024
    $region45: #{tpu_custom_call.1} parent=1 // pred_fallthru
      _
    %v80 = vld [vmem:[#allocation2] sm:$0xff]
    %v81 = vld [vmem:[#allocation5] sm:$0xff]
    %v82 = vld [vmem:[#allocation5 + $0x8] sm:$0xff]
    %v83 = vld [vmem:[#allocation5 + $0x10] sm:$0xff]
    %v84 = vld [vmem:[#allocation5 + $0x18] sm:$0xff]
    %v85 = vld [vmem:[#allocation5 + $0x20] sm:$0xff]
    %v86 = vld [vmem:[#allocation5 + $0x28] sm:$0xff]
    %v87 = vld [vmem:[#allocation5 + $0x30] sm:$0xff]
    %v88 = vld [vmem:[#allocation5 + $0x38] sm:$0xff]
    %v89 = vld [vmem:[%s2] sm:$0x1]
    %v91 = vlaneseq
    %v92 = vshrl.u32 %v91, 7
    %v93 = vsub.s32 0, %v92
    %v94 = vrot.slane %v89, %v93
    %vm96 = vcmask 523264
    %v98 = vsel %vm96, %v80, 0
    %100 = vmatprep.subr.mxu0 0.0
    %101 = vmatpush1.msra.mxu0 %v81
    %102 = vmatprep.subr.mxu0 0.0
    %103 = vmatpush1.msra.mxu0 %v82
    %104 = vmatprep.subr.mxu0 0.0
    %105 = vmatpush1.msra.mxu0 %v83
    %106 = vmatprep.subr.mxu0 0.0
    %107 = vmatpush1.msra.mxu0 %v84
    %108 = vmatprep.subr.mxu0 0.0
    %109 = vmatpush1.msra.mxu0 %v85
    %110 = vmatprep.subr.mxu0 0.0
    %111 = vmatpush1.msra.mxu0 %v86
    %112 = vmatprep.subr.mxu0 0.0
    %113 = vmatpush1.msra.mxu0 %v87
    %114 = vmatprep.subr.mxu0 0.0
    %115 = vmatpush1.msra.mxu0 %v88
    %116 = vmatprep.subr.mxu0 0.0
    %117 = vmatpush1.msra.mxu0 0.0
    %118 = vmatprep.subr.mxu0 0.0
    %119 = vmatpush1.msra.mxu0 0.0
    %120 = vmatprep.subr.mxu0 0.0
    %121 = vmatpush1.msra.mxu0 0.0
    %122 = vmatprep.subr.mxu0 0.0
    %123 = vmatpush1.msra.mxu0 0.0
    %124 = vmatprep.subr.mxu0 0.0
    %125 = vmatpush1.msra.mxu0 0.0
    %126 = vmatprep.subr.mxu0 0.0
    %127 = vmatpush1.msra.mxu0 0.0
    %128 = vmatprep.subr.mxu0 0.0
    %129 = vmatpush1.msra.mxu0 0.0
    %130 = vmatprep.subr.mxu0 0.0
    %131 = vmatpush1.msra.mxu0 0.0
    %132 = vmatprep.subr.mxu0 0.0
    %133 = vmatpush1.msra.mxu0 0.0
    %134 = vmatprep.subr.mxu0 0.0
    %135 = vmatpush1.msra.mxu0 0.0
    %136 = vmatprep.subr.mxu0 0.0
    %137 = vmatpush1.msra.mxu0 0.0
    %138 = vmatprep.subr.mxu0 0.0
    %139 = vmatpush1.msra.mxu0 0.0
    %140 = vmatprep.subr.mxu0 0.0
    %141 = vmatpush1.msra.mxu0 0.0
    %142 = vmatprep.subr.mxu0 0.0
    %143 = vmatpush1.msra.mxu0 0.0
    %144 = vmatprep.subr.mxu0 0.0
    %145 = vmatpush1.msra.mxu0 0.0
    %146 = vmatprep.subr.mxu0 0.0
    %147 = vmatpush1.msra.mxu0 0.0
    %148 = vmatprep.subr.mxu0 0.0
    %149 = vmatpush1.msra.mxu0 0.0
    %150 = vmatprep.subr.mxu0 0.0
    %151 = vmatpush1.msra.mxu0 0.0
    %152 = vmatprep.subr.mxu0 0.0
    %153 = vmatpush1.msra.mxu0 0.0
    %154 = vmatprep.subr.mxu0 0.0
    %155 = vmatpush1.msra.mxu0 0.0
    %156 = vmatprep.subr.mxu0 0.0
    %157 = vmatpush1.msra.mxu0 0.0
    %158 = vmatprep.subr.mxu0 0.0
    %159 = vmatpush1.msra.mxu0 0.0
    %160 = vmatprep.subr.mxu0 0.0
    %161 = vmatpush1.msra.mxu0 0.0
    %162 = vmatprep.subr.mxu0 0.0
    %163 = vmatpush1.msra.mxu0 0.0
    %164 = vmatprep.mubr.f32.mxu0 0.0
    %165 = vmatmul.mubr.f32.gmra.mrb[0].mxu0 %v98
    %v166 = vpop.f32.mrb[0].mxu0
    %v167 = vadd.f32 %v94, %v166
    %v168 = vpop.f32.mrb[0].mxu0
    %169 = vdwg.mxu0
    %v170 = vmul.f32 %v167, 0.2
    %v171 = vmax.f32 %v167, %v170
    %v172 = vld [vmem:[#allocation7] sm:$0xff]
    %v173 = vld [vmem:[#allocation7 + $0x8] sm:$0xff]
    %v174 = vld [vmem:[#allocation7 + $0x10] sm:$0xff]
    %v175 = vld [vmem:[#allocation7 + $0x18] sm:$0xff]
    %v176 = vld [vmem:[#allocation7 + $0x20] sm:$0xff]
    %v177 = vld [vmem:[#allocation7 + $0x28] sm:$0xff]
    %v178 = vld [vmem:[#allocation7 + $0x30] sm:$0xff]
    %v179 = vld [vmem:[#allocation7 + $0x38] sm:$0xff]
    %v180 = vld [vmem:[%s4] sm:$0x1]
    %v182 = vlaneseq
    %v183 = vshrl.u32 %v182, 7
    %v184 = vsub.s32 0, %v183
    %v185 = vrot.slane %v180, %v184
    %v188 = vsel %vm96, %v171, 0
    %190 = vmatprep.subr.mxu0 0.0
    %191 = vmatpush1.msra.mxu0 %v172
    %192 = vmatprep.subr.mxu0 0.0
    %193 = vmatpush1.msra.mxu0 %v173
    %194 = vmatprep.subr.mxu0 0.0
    %195 = vmatpush1.msra.mxu0 %v174
    %196 = vmatprep.subr.mxu0 0.0
    %197 = vmatpush1.msra.mxu0 %v175
    %198 = vmatprep.subr.mxu0 0.0
    %199 = vmatpush1.msra.mxu0 %v176
    %200 = vmatprep.subr.mxu0 0.0
    %201 = vmatpush1.msra.mxu0 %v177
    %202 = vmatprep.subr.mxu0 0.0
    %203 = vmatpush1.msra.mxu0 %v178
    %204 = vmatprep.subr.mxu0 0.0
    %205 = vmatpush1.msra.mxu0 %v179
    %206 = vmatprep.subr.mxu0 0.0
    %207 = vmatpush1.msra.mxu0 0.0
    %208 = vmatprep.subr.mxu0 0.0
    %209 = vmatpush1.msra.mxu0 0.0
    %210 = vmatprep.subr.mxu0 0.0
    %211 = vmatpush1.msra.mxu0 0.0
    %212 = vmatprep.subr.mxu0 0.0
    %213 = vmatpush1.msra.mxu0 0.0
    %214 = vmatprep.subr.mxu0 0.0
    %215 = vmatpush1.msra.mxu0 0.0
    %216 = vmatprep.subr.mxu0 0.0
    %217 = vmatpush1.msra.mxu0 0.0
    %218 = vmatprep.subr.mxu0 0.0
    %219 = vmatpush1.msra.mxu0 0.0
    %220 = vmatprep.subr.mxu0 0.0
    %221 = vmatpush1.msra.mxu0 0.0
    %222 = vmatprep.subr.mxu0 0.0
    %223 = vmatpush1.msra.mxu0 0.0
    %224 = vmatprep.subr.mxu0 0.0
    %225 = vmatpush1.msra.mxu0 0.0
    %226 = vmatprep.subr.mxu0 0.0
    %227 = vmatpush1.msra.mxu0 0.0
    %228 = vmatprep.subr.mxu0 0.0
    %229 = vmatpush1.msra.mxu0 0.0
    %230 = vmatprep.subr.mxu0 0.0
    %231 = vmatpush1.msra.mxu0 0.0
    %232 = vmatprep.subr.mxu0 0.0
    %233 = vmatpush1.msra.mxu0 0.0
    %234 = vmatprep.subr.mxu0 0.0
    %235 = vmatpush1.msra.mxu0 0.0
    %236 = vmatprep.subr.mxu0 0.0
    %237 = vmatpush1.msra.mxu0 0.0
    %238 = vmatprep.subr.mxu0 0.0
    %239 = vmatpush1.msra.mxu0 0.0
    %240 = vmatprep.subr.mxu0 0.0
    %241 = vmatpush1.msra.mxu0 0.0
    %242 = vmatprep.subr.mxu0 0.0
    %243 = vmatpush1.msra.mxu0 0.0
    %244 = vmatprep.subr.mxu0 0.0
    %245 = vmatpush1.msra.mxu0 0.0
    %246 = vmatprep.subr.mxu0 0.0
    %247 = vmatpush1.msra.mxu0 0.0
    %248 = vmatprep.subr.mxu0 0.0
    %249 = vmatpush1.msra.mxu0 0.0
    %250 = vmatprep.subr.mxu0 0.0
    %251 = vmatpush1.msra.mxu0 0.0
    %252 = vmatprep.subr.mxu0 0.0
    %253 = vmatpush1.msra.mxu0 0.0
    %254 = vmatprep.mubr.f32.mxu0 0.0
    %255 = vmatmul.mubr.f32.gmra.mrb[0].mxu0 %v188
    %v256 = vpop.f32.mrb[0].mxu0
    %v257 = vadd.f32 %v185, %v256
    %v258 = vpop.f32.mrb[0].mxu0
    %259 = vdwg.mxu0
    %v260 = vmul.f32 %v257, 0.2
    %v261 = vmax.f32 %v257, %v260
    %v262 = vld [vmem:[#allocation8] sm:$0xff]
    %v263 = vld [vmem:[#allocation8 + $0x8] sm:$0xff]
    %v264 = vld [vmem:[#allocation8 + $0x10] sm:$0xff]
    %v265 = vld [vmem:[#allocation8 + $0x18] sm:$0xff]
    %v266 = vld [vmem:[#allocation8 + $0x20] sm:$0xff]
    %v267 = vld [vmem:[#allocation8 + $0x28] sm:$0xff]
    %v268 = vld [vmem:[#allocation8 + $0x30] sm:$0xff]
    %v269 = vld [vmem:[#allocation8 + $0x38] sm:$0xff]
    %v270 = vld [vmem:[%s6] sm:$0x1]
    %v272 = vlaneseq
    %v273 = vshrl.u32 %v272, 7
    %v274 = vsub.s32 0, %v273
    %v275 = vrot.slane %v270, %v274
    %v278 = vsel %vm96, %v261, 0
    %280 = vmatprep.subr.mxu0 0.0
    %281 = vmatpush1.msra.mxu0 %v262
    %282 = vmatprep.subr.mxu0 0.0
    %283 = vmatpush1.msra.mxu0 %v263
    %284 = vmatprep.subr.mxu0 0.0
    %285 = vmatpush1.msra.mxu0 %v264
    %286 = vmatprep.subr.mxu0 0.0
    %287 = vmatpush1.msra.mxu0 %v265
    %288 = vmatprep.subr.mxu0 0.0
    %289 = vmatpush1.msra.mxu0 %v266
    %290 = vmatprep.subr.mxu0 0.0
    %291 = vmatpush1.msra.mxu0 %v267
    %292 = vmatprep.subr.mxu0 0.0
    %293 = vmatpush1.msra.mxu0 %v268
    %294 = vmatprep.subr.mxu0 0.0
    %295 = vmatpush1.msra.mxu0 %v269
    %296 = vmatprep.subr.mxu0 0.0
    %297 = vmatpush1.msra.mxu0 0.0
    %298 = vmatprep.subr.mxu0 0.0
    %299 = vmatpush1.msra.mxu0 0.0
    %300 = vmatprep.subr.mxu0 0.0
    %301 = vmatpush1.msra.mxu0 0.0
    %302 = vmatprep.subr.mxu0 0.0
    %303 = vmatpush1.msra.mxu0 0.0
    %304 = vmatprep.subr.mxu0 0.0
    %305 = vmatpush1.msra.mxu0 0.0
    %306 = vmatprep.subr.mxu0 0.0
    %307 = vmatpush1.msra.mxu0 0.0
    %308 = vmatprep.subr.mxu0 0.0
    %309 = vmatpush1.msra.mxu0 0.0
    %310 = vmatprep.subr.mxu0 0.0
    %311 = vmatpush1.msra.mxu0 0.0
    %312 = vmatprep.subr.mxu0 0.0
    %313 = vmatpush1.msra.mxu0 0.0
    %314 = vmatprep.subr.mxu0 0.0
    %315 = vmatpush1.msra.mxu0 0.0
    %316 = vmatprep.subr.mxu0 0.0
    %317 = vmatpush1.msra.mxu0 0.0
    %318 = vmatprep.subr.mxu0 0.0
    %319 = vmatpush1.msra.mxu0 0.0
    %320 = vmatprep.subr.mxu0 0.0
    %321 = vmatpush1.msra.mxu0 0.0
    %322 = vmatprep.subr.mxu0 0.0
    %323 = vmatpush1.msra.mxu0 0.0
    %324 = vmatprep.subr.mxu0 0.0
    %325 = vmatpush1.msra.mxu0 0.0
    %326 = vmatprep.subr.mxu0 0.0
    %327 = vmatpush1.msra.mxu0 0.0
    %328 = vmatprep.subr.mxu0 0.0
    %329 = vmatpush1.msra.mxu0 0.0
    %330 = vmatprep.subr.mxu0 0.0
    %331 = vmatpush1.msra.mxu0 0.0
    %332 = vmatprep.subr.mxu0 0.0
    %333 = vmatpush1.msra.mxu0 0.0
    %334 = vmatprep.subr.mxu0 0.0
    %335 = vmatpush1.msra.mxu0 0.0
    %336 = vmatprep.subr.mxu0 0.0
    %337 = vmatpush1.msra.mxu0 0.0
    %338 = vmatprep.subr.mxu0 0.0
    %339 = vmatpush1.msra.mxu0 0.0
    %340 = vmatprep.subr.mxu0 0.0
    %341 = vmatpush1.msra.mxu0 0.0
    %342 = vmatprep.subr.mxu0 0.0
    %343 = vmatpush1.msra.mxu0 0.0
    %344 = vmatprep.mubr.f32.mxu0 0.0
    %345 = vmatmul.mubr.f32.gmra.mrb[0].mxu0 %v278
    %v346 = vpop.f32.mrb[0].mxu0
    %v347 = vadd.f32 %v275, %v346
    %v348 = vpop.f32.mrb[0].mxu0
    %349 = vdwg.mxu0
    %v350 = vtanh.pop %v347
    %351 = vst.msk [vmem:[#allocation10] sm:$0xff] %vm96, %v350
    // Predicated region
    $region46: #{tpu_custom_call.1} parent=1 // pred_check
      _
    $region47: #{tpu_custom_call.1} parent=1 // pred_check_branch
      %353 = sbr.rel (0) target = $region49
    $region48: #{tpu_custom_call.1} parent=1 // pred_region
      %s355 = ssub.s32 128, 128
      %356 = vsyncadd [#allocation4], %s355
      %s358 = sshll.u32 [#allocation10], 4
      %s359 = int_to_ptr.vmem [resolvable:$true] %s358
      %361 = dma.vmem_to_hbm [thread:$0]  %s359, 128, %s7, [#allocation4]
    $region49: #{tpu_custom_call.1} parent=1 // pred_fallthru
      _
    // Predicated region
    $region50: #{tpu_custom_call.1} parent=1 // pred_check
      _
    $region51: #{tpu_custom_call.1} parent=1 // pred_check_branch
      %363 = sbr.rel (0) target = $region53
    $region52: #{tpu_custom_call.1} parent=1 // pred_region
      %364 = dma.done [#allocation4], 128
    $region53: #{tpu_custom_call.1} parent=1 // pred_fallthru
      _
    %365 = vsyncpa [#allocation3], 1
    %366 = vsyncpa [#allocation6], 1
    %367 = vsyncpa [#allocation9], 1
    %368 = vsyncpa [#allocation4], 1

</llo_original>
